<compile_context>
chip_gen: v7x
topology: tpu7x:2x2x1
jax: 0.10.0
libtpu: 0.0.40
codegen_flags: <defaults>
</compile_context>

<pallas_src>
import jax
import jax.numpy as jnp
from jax import lax
from jax.experimental import pallas as pl
from jax.experimental.pallas import tpu as pltpu


def _round_up(x: int, m: int) -> int:
    return ((x + m - 1) // m) * m


def _critic_kernel(s_ref, a_ref, w1s_ref, w1a_ref, b1_ref, w2_ref, b2_ref,
                   w3_ref, b3_ref, o_ref):
    """Feature-major fused Critic MLP; activations are (H, TB), batch in lanes."""
    # Layer 1: fused concat -> two MXU passes against pre-split W1.
    # dot_general contracts the feature dims directly (A @ B^T form), producing
    # (H, TB) without a materialized activation transpose.
    dn = (((1,), (1,)), ((), ()))   # contract W "in" dim with activation feature dim
    h1 = lax.dot_general(w1s_ref[...], s_ref[...], dn,
                         preferred_element_type=jnp.float32)
    h1 = h1 + lax.dot_general(w1a_ref[...], a_ref[...], dn,
                              preferred_element_type=jnp.float32)
    h1 = jnp.maximum(h1 + b1_ref[...], 0.0)                       # (H, TB) ReLU

    # Layer 2: (H, H) @ (H, TB) on the MXU.
    h2 = jnp.dot(w2_ref[...], h1, preferred_element_type=jnp.float32) + b2_ref[...]
    h2 = jnp.maximum(h2, 0.0)                                     # (H, TB) ReLU

    # Layer 3 (out dim 1): VPU multiply + sublane reduce -> lane-dense (1, TB).
    q = jnp.sum(h2 * w3_ref[...], axis=0, keepdims=True) + b3_ref[...]
    o_ref[...] = q.astype(o_ref.dtype)


@jax.jit
def critic_forward(state, action, params):
    """Pallas implementation of Critic.forward.

    state:  (B, state_size)  or (state_size,)
    action: (B, action_size) or (action_size,)
    returns (B, 1) float32
    """
    if state.ndim == 1:
        state = state[None, :]
    if action.ndim == 1:
        action = action[None, :]
    state = state.astype(jnp.float32)
    action = action.astype(jnp.float32)
    # TODO(synk): if callers keep state/action in bf16, feed bf16 straight to the
    # MXU (f32 accumulate) instead of casting; skipped since inputs are f32 here.

    w1s, w1a, b1, w2, b2, w3, b3 = params
    B, S = state.shape
    A = action.shape[1]
    H = w2.shape[0]

    # Batch-tile selection (static under jit):
    #   * B <= 128: one exact tile (block == full extents, no masking at all).
    #   * B  > 128: lane-aligned tile (multiple of 128), capped at 2048 and at
    #     ~ceil(B/2) so the parallel grid has >= 2 steps (both v7x TCs busy).
    #     No wrapper-side pad: the ragged tail is a partial (masked) last block.
    if B <= 128:
        TB = B
    else:
        TB = min(2048, _round_up(pl.cdiv(B, 2), 128))
    grid = (pl.cdiv(B, TB),)

    def resident(arr):
        # Same block every grid step -> weights/biases stay loaded in VMEM.
        return pl.BlockSpec(arr.shape, lambda i: (0, 0))

    n_weight_elems = sum(int(p.size) for p in params)
    cost = pl.CostEstimate(
        flops=2 * B * ((S + A) * H + H * H + H),
        transcendentals=0,
        bytes_accessed=4 * (B * (S + A + 1) + n_weight_elems),
    )

    out = pl.pallas_call(
        _critic_kernel,
        out_shape=jax.ShapeDtypeStruct((1, B), jnp.float32),   # lane-dense output row
        grid=grid,
        in_specs=[
            pl.BlockSpec((TB, S), lambda i: (i, 0)),   # state tile
            pl.BlockSpec((TB, A), lambda i: (i, 0)),   # action tile
            resident(w1s), resident(w1a), resident(b1),
            resident(w2), resident(b2),
            resident(w3), resident(b3),
        ],
        out_specs=pl.BlockSpec((1, TB), lambda i: (0, i)),
        compiler_params=pltpu.CompilerParams(
            dimension_semantics=("parallel",),
        ),
        cost_estimate=cost,
    )(state, action, w1s, w1a, b1, w2, b2, w3, b3)

    # (1, B) lane-dense row -> (B, 1) column to match nn.Sequential's output.
    return out[0, :, None]


def init_critic_params(key, state_size, action_size, hidden_size):
    """nn.Linear-style init (U[-1/sqrt(fan_in), 1/sqrt(fan_in)]).

    Weights are kept in torch's (out, in) layout and layer-1 is pre-split over
    [state | action] so the kernel fuses the concat. Biases are stored as
    (out, 1) columns and W3 as an (H, 1) column so the feature-major (H, TB)
    activations broadcast cheaply along lanes.
    """
    def linear(key, fan_in, fan_out):
        kw, kb = jax.random.split(key)
        bound = 1.0 / jnp.sqrt(jnp.float32(fan_in))
        w = jax.random.uniform(kw, (fan_out, fan_in), jnp.float32, -bound, bound)
        b = jax.random.uniform(kb, (fan_out,), jnp.float32, -bound, bound)
        return w, b

    k1, k2, k3 = jax.random.split(key, 3)
    din = state_size + action_size
    w1, b1 = linear(k1, din, hidden_size)
    w2, b2 = linear(k2, hidden_size, hidden_size)
    w3, b3 = linear(k3, hidden_size, 1)
    w1s, w1a = w1[:, :state_size], w1[:, state_size:]
    return (w1s, w1a, b1[:, None], w2, b2[:, None], w3.T, b3[:, None])


def critic_reference(state, action, params):
    """Pure-JAX reference (canonical concat + dense form)."""
    if state.ndim == 1:
        state = state[None, :]
    if action.ndim == 1:
        action = action[None, :]
    w1s, w1a, b1, w2, b2, w3, b3 = params
    w1 = jnp.concatenate([w1s, w1a], axis=1)                     # (H, S+A)
    x = jnp.concatenate([state, action], axis=-1).astype(jnp.float32)
    h = jnp.maximum(x @ w1.T + b1[:, 0], 0.0)
    h = jnp.maximum(h @ w2.T + b2[:, 0], 0.0)
    return h @ w3 + b3[0]


if __name__ == "__main__":
    STATE_SIZE = 12
    ACTION_SIZE = 4
    HIDDEN_SIZE = 32

    key = jax.random.PRNGKey(0)
    k_params, k_state, k_action = jax.random.split(key, 3)
    params = init_critic_params(k_params, STATE_SIZE, ACTION_SIZE, HIDDEN_SIZE)

    # Small batch: single exact tile (block == array extents, no masking).
    B_small = 2
    state = jax.random.normal(k_state, (B_small, STATE_SIZE), jnp.float32)
    action = jax.random.normal(k_action, (B_small, ACTION_SIZE), jnp.float32)
    out = jax.block_until_ready(critic_forward(state, action, params))
    ref = critic_reference(state, action, params)
    assert out.shape == (B_small, 1), out.shape
    assert jnp.allclose(out, ref, atol=1e-4, rtol=1e-4), (out, ref)

    # Ragged multi-tile batch: 2-step parallel grid with a partial last block
    # (exercises the no-pad path and lane-dense output masking).
    B_big = 300
    kb_s, kb_a = jax.random.split(jax.random.PRNGKey(1))
    state_b = jax.random.normal(kb_s, (B_big, STATE_SIZE), jnp.float32)
    action_b = jax.random.normal(kb_a, (B_big, ACTION_SIZE), jnp.float32)
    out_b = jax.block_until_ready(critic_forward(state_b, action_b, params))
    ref_b = critic_reference(state_b, action_b, params)
    assert out_b.shape == (B_big, 1), out_b.shape
    assert jnp.allclose(out_b, ref_b, atol=1e-4, rtol=1e-4)

    print("KERNEL_OK")
</pallas_src>

<mosaic_0001>
module attributes {stable_mosaic.version = 11 : i64} {
  func.func @_critic_kernel(%arg0: i32, %arg1: memref<2x12xf32, #tpu.memory_space<vmem>>, %arg2: memref<2x4xf32, #tpu.memory_space<vmem>>, %arg3: memref<32x12xf32, #tpu.memory_space<vmem>>, %arg4: memref<32x4xf32, #tpu.memory_space<vmem>>, %arg5: memref<32x1xf32, #tpu.memory_space<vmem>>, %arg6: memref<32x32xf32, #tpu.memory_space<vmem>>, %arg7: memref<32x1xf32, #tpu.memory_space<vmem>>, %arg8: memref<32x1xf32, #tpu.memory_space<vmem>>, %arg9: memref<1x1xf32, #tpu.memory_space<vmem>>, %arg10: memref<1x2xf32, #tpu.memory_space<vmem>>) attributes {dimension_semantics = [#tpu.dimension_semantics<parallel>], iteration_bounds = array<i64: 1>, scalar_prefetch = 0 : i64, scratch_operands = 0 : i64, tpu.core_type = #tpu.core_type<tc>, window_params = [{transform_indices = @transform_0, window_bounds = array<i64: 2, 12>}, {transform_indices = @transform_1, window_bounds = array<i64: 2, 4>}, {pipeline_mode = #tpu.pipeline_mode<synchronous>, transform_indices = @transform_2, window_bounds = array<i64: 32, 12>}, {pipeline_mode = #tpu.pipeline_mode<synchronous>, transform_indices = @transform_3, window_bounds = array<i64: 32, 4>}, {pipeline_mode = #tpu.pipeline_mode<synchronous>, transform_indices = @transform_4, window_bounds = array<i64: 32, 1>}, {pipeline_mode = #tpu.pipeline_mode<synchronous>, transform_indices = @transform_5, window_bounds = array<i64: 32, 32>}, {pipeline_mode = #tpu.pipeline_mode<synchronous>, transform_indices = @transform_6, window_bounds = array<i64: 32, 1>}, {pipeline_mode = #tpu.pipeline_mode<synchronous>, transform_indices = @transform_7, window_bounds = array<i64: 32, 1>}, {pipeline_mode = #tpu.pipeline_mode<synchronous>, transform_indices = @transform_8, window_bounds = array<i64: 1, 1>}, {transform_indices = @transform_9, window_bounds = array<i64: 1, 2>}]} {
    %c0 = arith.constant 0 : index
    %c0_0 = arith.constant 0 : index
    %0 = vector.load %arg3[%c0, %c0_0] : memref<32x12xf32, #tpu.memory_space<vmem>>, vector<32x12xf32>
    %c0_1 = arith.constant 0 : index
    %c0_2 = arith.constant 0 : index
    %1 = vector.load %arg1[%c0_1, %c0_2] : memref<2x12xf32, #tpu.memory_space<vmem>>, vector<2x12xf32>
    %cst = arith.constant dense<0.000000e+00> : vector<32x2xf32>
    %2 = tpu.matmul %0, %1, %cst {dimension_numbers = #tpu.dot_dimension_numbers<[1], [1], [0], [0], [0, 0, 1, 0], [], []>} : vector<32x12xf32>, vector<2x12xf32>, vector<32x2xf32> -> vector<32x2xf32>
    %c0_3 = arith.constant 0 : index
    %c0_4 = arith.constant 0 : index
    %3 = vector.load %arg4[%c0_3, %c0_4] : memref<32x4xf32, #tpu.memory_space<vmem>>, vector<32x4xf32>
    %c0_5 = arith.constant 0 : index
    %c0_6 = arith.constant 0 : index
    %4 = vector.load %arg2[%c0_5, %c0_6] : memref<2x4xf32, #tpu.memory_space<vmem>>, vector<2x4xf32>
    %cst_7 = arith.constant dense<0.000000e+00> : vector<32x2xf32>
    %5 = tpu.matmul %3, %4, %cst_7 {dimension_numbers = #tpu.dot_dimension_numbers<[1], [1], [0], [0], [0, 0, 1, 0], [], []>} : vector<32x4xf32>, vector<2x4xf32>, vector<32x2xf32> -> vector<32x2xf32>
    %6 = arith.addf %2, %5 : vector<32x2xf32>
    %c0_8 = arith.constant 0 : index
    %c0_9 = arith.constant 0 : index
    %7 = vector.load %arg5[%c0_8, %c0_9] : memref<32x1xf32, #tpu.memory_space<vmem>>, vector<32x1xf32>
    %8 = vector.broadcast %7 : vector<32x1xf32> to vector<32x2xf32>
    %9 = arith.addf %6, %8 : vector<32x2xf32>
    %cst_10 = arith.constant 0.000000e+00 : f32
    %10 = vector.broadcast %cst_10 : f32 to vector<32x2xf32>
    %11 = arith.maximumf %9, %10 : vector<32x2xf32>
    %c0_11 = arith.constant 0 : index
    %c0_12 = arith.constant 0 : index
    %12 = vector.load %arg6[%c0_11, %c0_12] : memref<32x32xf32, #tpu.memory_space<vmem>>, vector<32x32xf32>
    %cst_13 = arith.constant dense<0.000000e+00> : vector<32x2xf32>
    %13 = tpu.matmul %12, %11, %cst_13 {dimension_numbers = #tpu.dot_dimension_numbers<[1], [0], [0], [1], [0, 0, 1, 1], [], []>} : vector<32x32xf32>, vector<32x2xf32>, vector<32x2xf32> -> vector<32x2xf32>
    %c0_14 = arith.constant 0 : index
    %c0_15 = arith.constant 0 : index
    %14 = vector.load %arg7[%c0_14, %c0_15] : memref<32x1xf32, #tpu.memory_space<vmem>>, vector<32x1xf32>
    %15 = vector.broadcast %14 : vector<32x1xf32> to vector<32x2xf32>
    %16 = arith.addf %13, %15 : vector<32x2xf32>
    %cst_16 = arith.constant 0.000000e+00 : f32
    %17 = vector.broadcast %cst_16 : f32 to vector<32x2xf32>
    %18 = arith.maximumf %16, %17 : vector<32x2xf32>
    %c0_17 = arith.constant 0 : index
    %c0_18 = arith.constant 0 : index
    %19 = vector.load %arg8[%c0_17, %c0_18] : memref<32x1xf32, #tpu.memory_space<vmem>>, vector<32x1xf32>
    %20 = vector.broadcast %19 : vector<32x1xf32> to vector<32x2xf32>
    %21 = arith.mulf %18, %20 : vector<32x2xf32>
    %cst_19 = arith.constant dense<0.000000e+00> : vector<2xf32>
    %22 = vector.multi_reduction <add>, %21, %cst_19 [0] : vector<32x2xf32> to vector<2xf32>
    %23 = vector.shape_cast %22 : vector<2xf32> to vector<1x2xf32>
    %c0_20 = arith.constant 0 : index
    %c0_21 = arith.constant 0 : index
    %24 = vector.load %arg9[%c0_20, %c0_21] : memref<1x1xf32, #tpu.memory_space<vmem>>, vector<1x1xf32>
    %25 = vector.broadcast %24 : vector<1x1xf32> to vector<1x2xf32>
    %26 = arith.addf %23, %25 : vector<1x2xf32>
    %c0_22 = arith.constant 0 : index
    %c0_23 = arith.constant 0 : index
    %27 = vector.load %arg10[%c0_22, %c0_23] : memref<1x2xf32, #tpu.memory_space<vmem>>, vector<1x2xf32>
    tpu.vector_store %arg10[%c0_22, %c0_23], %26 {strides = array<i32>} : memref<1x2xf32, #tpu.memory_space<vmem>>, vector<1x2xf32>,
    return
  }
  func.func @transform_0(%arg0: i32) -> (i32, i32) {
    %c0_i32 = arith.constant 0 : i32
    %c0_i32_0 = arith.constant 0 : i32
    return %arg0, %c0_i32 : i32, i32
  }
  func.func @transform_1(%arg0: i32) -> (i32, i32) {
    %c0_i32 = arith.constant 0 : i32
    %c0_i32_0 = arith.constant 0 : i32
    return %arg0, %c0_i32 : i32, i32
  }
  func.func @transform_2(%arg0: i32) -> (i32, i32) {
    %c0_i32 = arith.constant 0 : i32
    %c0_i32_0 = arith.constant 0 : i32
    %c0_i32_1 = arith.constant 0 : i32
    return %c0_i32, %c0_i32_0 : i32, i32
  }
  func.func @transform_3(%arg0: i32) -> (i32, i32) {
    %c0_i32 = arith.constant 0 : i32
    %c0_i32_0 = arith.constant 0 : i32
    %c0_i32_1 = arith.constant 0 : i32
    return %c0_i32, %c0_i32_0 : i32, i32
  }
  func.func @transform_4(%arg0: i32) -> (i32, i32) {
    %c0_i32 = arith.constant 0 : i32
    %c0_i32_0 = arith.constant 0 : i32
    %c0_i32_1 = arith.constant 0 : i32
    return %c0_i32, %c0_i32_0 : i32, i32
  }
  func.func @transform_5(%arg0: i32) -> (i32, i32) {
    %c0_i32 = arith.constant 0 : i32
    %c0_i32_0 = arith.constant 0 : i32
    %c0_i32_1 = arith.constant 0 : i32
    return %c0_i32, %c0_i32_0 : i32, i32
  }
  func.func @transform_6(%arg0: i32) -> (i32, i32) {
    %c0_i32 = arith.constant 0 : i32
    %c0_i32_0 = arith.constant 0 : i32
    %c0_i32_1 = arith.constant 0 : i32
    return %c0_i32, %c0_i32_0 : i32, i32
  }
  func.func @transform_7(%arg0: i32) -> (i32, i32) {
    %c0_i32 = arith.constant 0 : i32
    %c0_i32_0 = arith.constant 0 : i32
    %c0_i32_1 = arith.constant 0 : i32
    return %c0_i32, %c0_i32_0 : i32, i32
  }
  func.func @transform_8(%arg0: i32) -> (i32, i32) {
    %c0_i32 = arith.constant 0 : i32
    %c0_i32_0 = arith.constant 0 : i32
    %c0_i32_1 = arith.constant 0 : i32
    return %c0_i32, %c0_i32_0 : i32, i32
  }
  func.func @transform_9(%arg0: i32) -> (i32, i32) {
    %c0_i32 = arith.constant 0 : i32
    %c0_i32_0 = arith.constant 0 : i32
    return %c0_i32, %arg0 : i32, i32
  }
}

</mosaic_0001>

<llo_original>
// kernel: critic_forward.1
$region0: #{critic_forward.1}
  #allocation0 [shape = 'u32[]', space=smem, size = 0x4, offset = 0x4, fixed_abs, tag = 'smem constant byte address 0x4 - core index']
  #allocation1 [shape = 'u32[144,128]{1,0:T(1,128)}', space=vmem, size = 0x12000, scoped, tag = 'internal scratch']
  #allocation2 [shape = 'f32[1,1]{1,0:T(1,128)S(1)}', space=vmem, size = 0x200, scoped, tag = 'scoped memory for critic_forward.1']
  %s0 = inlined_call_operand.vmem [shape: f32[2,12], index: 0, kind: input, shape index: {}]
  %s1 = inlined_call_operand.vmem [shape: f32[2,4], index: 1, kind: input, shape index: {}]
  %s2 = inlined_call_operand.vmem [shape: f32[32,12], index: 2, kind: input, shape index: {}]
  %s3 = inlined_call_operand.vmem [shape: f32[32,4], index: 3, kind: input, shape index: {}]
  %s4 = inlined_call_operand.vmem [shape: f32[32,1], index: 4, kind: input, shape index: {}]
  %s5 = inlined_call_operand.vmem [shape: f32[32,32], index: 5, kind: input, shape index: {}]
  %s6 = inlined_call_operand.vmem [shape: f32[32,1], index: 6, kind: input, shape index: {}]
  %s7 = inlined_call_operand.vmem [shape: f32[32,1], index: 7, kind: input, shape index: {}]
  %s8 = inlined_call_operand.<no memory space> [shape: f32[1,1], index: 8, kind: input, shape index: {}]
  %s9 = inlined_call_operand.hbm [shape: f32[1,2], index: 9, kind: output, shape index: {}]
  %s10 = sld [smem:[#allocation0]]
  $region46: #{critic_forward.1} parent=0
    _
  %s12 = ssub.s32 1, %s10
  %s13 = scalar_select 0, %s12, %s10
  %v14 = vstv %s8
  %15 = vst [vmem:[#allocation2] sm:$0x1] %v14
  $region1: #{critic_forward.1} parent=0
    #allocation3 [shape = 'u8[512]{0}', space=vmem, size = 0x400, scoped, tag = 'output window, operand 0, single buffered']
    #allocation4 [shape = 's32[1]{0}', space=sflag, size = 0x4, scoped, tag = 'scoped memory for critic_forward.1']
    %16 = vsyncpa [#allocation4], 0
    // Predicated region
    $region2: #{critic_forward.1} parent=1 // pred_check
      _
    $region3: #{critic_forward.1} parent=1 // pred_check_branch
      %18 = sbr.rel (0) target = $region5
    $region4: #{critic_forward.1} parent=1 // pred_region
      _
    $region5: #{critic_forward.1} parent=1 // pred_fallthru
      _
    // Predicated region
    $region6: #{critic_forward.1} parent=1 // pred_check
      _
    $region7: #{critic_forward.1} parent=1 // pred_check_branch
      %20 = sbr.rel (0) target = $region9
    $region8: #{critic_forward.1} parent=1 // pred_region
      _
    $region9: #{critic_forward.1} parent=1 // pred_fallthru
      _
    // Predicated region
    $region10: #{critic_forward.1} parent=1 // pred_check
      _
    $region11: #{critic_forward.1} parent=1 // pred_check_branch
      %22 = sbr.rel (0) target = $region13
    $region12: #{critic_forward.1} parent=1 // pred_region
      _
    $region13: #{critic_forward.1} parent=1 // pred_fallthru
      _
    // Predicated region
    $region14: #{critic_forward.1} parent=1 // pred_check
      _
    $region15: #{critic_forward.1} parent=1 // pred_check_branch
      %24 = sbr.rel (0) target = $region17
    $region16: #{critic_forward.1} parent=1 // pred_region
      _
    $region17: #{critic_forward.1} parent=1 // pred_fallthru
      _
    // Predicated region
    $region18: #{critic_forward.1} parent=1 // pred_check
      _
    $region19: #{critic_forward.1} parent=1 // pred_check_branch
      %26 = sbr.rel (0) target = $region21
    $region20: #{critic_forward.1} parent=1 // pred_region
      _
    $region21: #{critic_forward.1} parent=1 // pred_fallthru
      _
    // Predicated region
    $region22: #{critic_forward.1} parent=1 // pred_check
      _
    $region23: #{critic_forward.1} parent=1 // pred_check_branch
      %28 = sbr.rel (0) target = $region25
    $region24: #{critic_forward.1} parent=1 // pred_region
      _
    $region25: #{critic_forward.1} parent=1 // pred_fallthru
      _
    // Predicated region
    $region26: #{critic_forward.1} parent=1 // pred_check
      _
    $region27: #{critic_forward.1} parent=1 // pred_check_branch
      %30 = sbr.rel (0) target = $region29
    $region28: #{critic_forward.1} parent=1 // pred_region
      _
    $region29: #{critic_forward.1} parent=1 // pred_fallthru
      _
    // Predicated region
    $region30: #{critic_forward.1} parent=1 // pred_check
      _
    $region31: #{critic_forward.1} parent=1 // pred_check_branch
      %32 = sbr.rel (0) target = $region33
    $region32: #{critic_forward.1} parent=1 // pred_region
      _
    $region33: #{critic_forward.1} parent=1 // pred_fallthru
      _
    // Predicated region
    $region34: #{critic_forward.1} parent=1 // pred_check
      _
    $region35: #{critic_forward.1} parent=1 // pred_check_branch
      %34 = sbr.rel (0) target = $region37
    $region36: #{critic_forward.1} parent=1 // pred_region
      _
    $region37: #{critic_forward.1} parent=1 // pred_fallthru
      _
    %v35 = vld [vmem:[%s2] sm:$0xff]
    %v36 = vld [vmem:[%s2 + $0x8] sm:$0xff]
    %v37 = vld [vmem:[%s2 + $0x10] sm:$0xff]
    %v38 = vld [vmem:[%s2 + $0x18] sm:$0xff]
    %v39 = vld [vmem:[%s0] sm:$0x3]
    %v40 = vld [vmem:[%s3] sm:$0xff]
    %v41 = vld [vmem:[%s3 + $0x8] sm:$0xff]
    %v42 = vld [vmem:[%s3 + $0x10] sm:$0xff]
    %v43 = vld [vmem:[%s3 + $0x18] sm:$0xff]
    %v44 = vld [vmem:[%s1] sm:$0x3]
    %vm45 = vcmask 31744
    %v47 = vsel %vm45, %v40, 0
    %v50 = vsel %vm45, %v41, 0
    %v53 = vsel %vm45, %v42, 0
    %v56 = vsel %vm45, %v43, 0
    %v59 = vsel %vm45, %v44, 0
    %61 = vmatprep.subr.mxu0 0.0
    %62 = vmatpush1.xpose.msra.mxu0 %v59
    %63 = vmatprep.subr.mxu0 0.0
    %64 = vmatpush1.xpose.msra.mxu0 0.0
    %65 = vmatprep.subr.mxu0 0.0
    %66 = vmatpush1.xpose.msra.mxu0 0.0
    %67 = vmatprep.subr.mxu0 0.0
    %68 = vmatpush1.xpose.msra.mxu0 0.0
    %69 = vmatprep.subr.mxu0 0.0
    %70 = vmatpush1.xpose.msra.mxu0 0.0
    %71 = vmatprep.subr.mxu0 0.0
    %72 = vmatpush1.xpose.msra.mxu0 0.0
    %73 = vmatprep.subr.mxu0 0.0
    %74 = vmatpush1.xpose.msra.mxu0 0.0
    %75 = vmatprep.subr.mxu0 0.0
    %76 = vmatpush1.xpose.msra.mxu0 0.0
    %77 = vmatprep.subr.mxu0 0.0
    %78 = vmatpush1.xpose.msra.mxu0 0.0
    %79 = vmatprep.subr.mxu0 0.0
    %80 = vmatpush1.xpose.msra.mxu0 0.0
    %81 = vmatprep.subr.mxu0 0.0
    %82 = vmatpush1.xpose.msra.mxu0 0.0
    %83 = vmatprep.subr.mxu0 0.0
    %84 = vmatpush1.xpose.msra.mxu0 0.0
    %85 = vmatprep.subr.mxu0 0.0
    %86 = vmatpush1.xpose.msra.mxu0 0.0
    %87 = vmatprep.subr.mxu0 0.0
    %88 = vmatpush1.xpose.msra.mxu0 0.0
    %89 = vmatprep.subr.mxu0 0.0
    %90 = vmatpush1.xpose.msra.mxu0 0.0
    %91 = vmatprep.subr.mxu0 0.0
    %92 = vmatpush1.xpose.msra.mxu0 0.0
    %93 = vmatprep.subr.mxu0 0.0
    %94 = vmatpush1.xpose.msra.mxu0 0.0
    %95 = vmatprep.subr.mxu0 0.0
    %96 = vmatpush1.xpose.msra.mxu0 0.0
    %97 = vmatprep.subr.mxu0 0.0
    %98 = vmatpush1.xpose.msra.mxu0 0.0
    %99 = vmatprep.subr.mxu0 0.0
    %100 = vmatpush1.xpose.msra.mxu0 0.0
    %101 = vmatprep.subr.mxu0 0.0
    %102 = vmatpush1.xpose.msra.mxu0 0.0
    %103 = vmatprep.subr.mxu0 0.0
    %104 = vmatpush1.xpose.msra.mxu0 0.0
    %105 = vmatprep.subr.mxu0 0.0
    %106 = vmatpush1.xpose.msra.mxu0 0.0
    %107 = vmatprep.subr.mxu0 0.0
    %108 = vmatpush1.xpose.msra.mxu0 0.0
    %109 = vmatprep.subr.mxu0 0.0
    %110 = vmatpush1.xpose.msra.mxu0 0.0
    %111 = vmatprep.subr.mxu0 0.0
    %112 = vmatpush1.xpose.msra.mxu0 0.0
    %113 = vmatprep.subr.mxu0 0.0
    %114 = vmatpush1.xpose.msra.mxu0 0.0
    %115 = vmatprep.subr.mxu0 0.0
    %116 = vmatpush1.xpose.msra.mxu0 0.0
    %117 = vmatprep.subr.mxu0 0.0
    %118 = vmatpush1.xpose.msra.mxu0 0.0
    %119 = vmatprep.subr.mxu0 0.0
    %120 = vmatpush1.xpose.msra.mxu0 0.0
    %121 = vmatprep.subr.mxu0 0.0
    %122 = vmatpush1.xpose.msra.mxu0 0.0
    %123 = vmatprep.subr.mxu0 0.0
    %124 = vmatpush1.xpose.msra.mxu0 0.0
    %125 = vmatprep.mubr.f32.mxu0 0.0
    %126 = vmatmul.mubr.f32.gmra.mrb[0].mxu0 %v47
    %v127 = vpop.f32.mrb[0].mxu0
    %v128 = vadd.f32 0.0, %v127
    %v129 = vpop.f32.mrb[0].mxu0
    %130 = vmatprep.mubr.f32.mxu0 0.0
    %131 = vmatmul.mubr.f32.gmra.mrb[0].mxu0 %v50
    %v132 = vpop.f32.mrb[0].mxu0
    %v133 = vadd.f32 0.0, %v132
    %v134 = vpop.f32.mrb[0].mxu0
    %135 = vmatprep.mubr.f32.mxu0 0.0
    %136 = vmatmul.mubr.f32.gmra.mrb[0].mxu0 %v53
    %v137 = vpop.f32.mrb[0].mxu0
    %v138 = vadd.f32 0.0, %v137
    %v139 = vpop.f32.mrb[0].mxu0
    %140 = vmatprep.mubr.f32.mxu0 0.0
    %141 = vmatmul.mubr.f32.gmra.mrb[0].mxu0 %v56
    %v142 = vpop.f32.mrb[0].mxu0
    %v143 = vadd.f32 0.0, %v142
    %v144 = vpop.f32.mrb[0].mxu0
    %145 = vdwg.mxu0
    %vm146 = vcmask 97280
    %v148 = vsel %vm146, %v35, 0
    %v151 = vsel %vm146, %v36, 0
    %v154 = vsel %vm146, %v37, 0
    %v157 = vsel %vm146, %v38, 0
    %v160 = vsel %vm146, %v39, 0
    %162 = vmatprep.subr.mxu0 0.0
    %163 = vmatpush1.xpose.msra.mxu0 %v160
    %164 = vmatprep.subr.mxu0 0.0
    %165 = vmatpush1.xpose.msra.mxu0 0.0
    %166 = vmatprep.subr.mxu0 0.0
    %167 = vmatpush1.xpose.msra.mxu0 0.0
    %168 = vmatprep.subr.mxu0 0.0
    %169 = vmatpush1.xpose.msra.mxu0 0.0
    %170 = vmatprep.subr.mxu0 0.0
    %171 = vmatpush1.xpose.msra.mxu0 0.0
    %172 = vmatprep.subr.mxu0 0.0
    %173 = vmatpush1.xpose.msra.mxu0 0.0
    %174 = vmatprep.subr.mxu0 0.0
    %175 = vmatpush1.xpose.msra.mxu0 0.0
    %176 = vmatprep.subr.mxu0 0.0
    %177 = vmatpush1.xpose.msra.mxu0 0.0
    %178 = vmatprep.subr.mxu0 0.0
    %179 = vmatpush1.xpose.msra.mxu0 0.0
    %180 = vmatprep.subr.mxu0 0.0
    %181 = vmatpush1.xpose.msra.mxu0 0.0
    %182 = vmatprep.subr.mxu0 0.0
    %183 = vmatpush1.xpose.msra.mxu0 0.0
    %184 = vmatprep.subr.mxu0 0.0
    %185 = vmatpush1.xpose.msra.mxu0 0.0
    %186 = vmatprep.subr.mxu0 0.0
    %187 = vmatpush1.xpose.msra.mxu0 0.0
    %188 = vmatprep.subr.mxu0 0.0
    %189 = vmatpush1.xpose.msra.mxu0 0.0
    %190 = vmatprep.subr.mxu0 0.0
    %191 = vmatpush1.xpose.msra.mxu0 0.0
    %192 = vmatprep.subr.mxu0 0.0
    %193 = vmatpush1.xpose.msra.mxu0 0.0
    %194 = vmatprep.subr.mxu0 0.0
    %195 = vmatpush1.xpose.msra.mxu0 0.0
    %196 = vmatprep.subr.mxu0 0.0
    %197 = vmatpush1.xpose.msra.mxu0 0.0
    %198 = vmatprep.subr.mxu0 0.0
    %199 = vmatpush1.xpose.msra.mxu0 0.0
    %200 = vmatprep.subr.mxu0 0.0
    %201 = vmatpush1.xpose.msra.mxu0 0.0
    %202 = vmatprep.subr.mxu0 0.0
    %203 = vmatpush1.xpose.msra.mxu0 0.0
    %204 = vmatprep.subr.mxu0 0.0
    %205 = vmatpush1.xpose.msra.mxu0 0.0
    %206 = vmatprep.subr.mxu0 0.0
    %207 = vmatpush1.xpose.msra.mxu0 0.0
    %208 = vmatprep.subr.mxu0 0.0
    %209 = vmatpush1.xpose.msra.mxu0 0.0
    %210 = vmatprep.subr.mxu0 0.0
    %211 = vmatpush1.xpose.msra.mxu0 0.0
    %212 = vmatprep.subr.mxu0 0.0
    %213 = vmatpush1.xpose.msra.mxu0 0.0
    %214 = vmatprep.subr.mxu0 0.0
    %215 = vmatpush1.xpose.msra.mxu0 0.0
    %216 = vmatprep.subr.mxu0 0.0
    %217 = vmatpush1.xpose.msra.mxu0 0.0
    %218 = vmatprep.subr.mxu0 0.0
    %219 = vmatpush1.xpose.msra.mxu0 0.0
    %220 = vmatprep.subr.mxu0 0.0
    %221 = vmatpush1.xpose.msra.mxu0 0.0
    %222 = vmatprep.subr.mxu0 0.0
    %223 = vmatpush1.xpose.msra.mxu0 0.0
    %224 = vmatprep.subr.mxu0 0.0
    %225 = vmatpush1.xpose.msra.mxu0 0.0
    %226 = vmatprep.mubr.f32.mxu0 0.0
    %227 = vmatmul.mubr.f32.gmra.mrb[0].mxu0 %v148
    %v228 = vpop.f32.mrb[0].mxu0
    %v229 = vadd.f32 %v128, %v228
    %v230 = vpop.f32.mrb[0].mxu0
    %231 = vmatprep.mubr.f32.mxu0 0.0
    %232 = vmatmul.mubr.f32.gmra.mrb[0].mxu0 %v151
    %v233 = vpop.f32.mrb[0].mxu0
    %v234 = vadd.f32 %v133, %v233
    %v235 = vpop.f32.mrb[0].mxu0
    %236 = vmatprep.mubr.f32.mxu0 0.0
    %237 = vmatmul.mubr.f32.gmra.mrb[0].mxu0 %v154
    %v238 = vpop.f32.mrb[0].mxu0
    %v239 = vadd.f32 %v138, %v238
    %v240 = vpop.f32.mrb[0].mxu0
    %241 = vmatprep.mubr.f32.mxu0 0.0
    %242 = vmatmul.mubr.f32.gmra.mrb[0].mxu0 %v157
    %v243 = vpop.f32.mrb[0].mxu0
    %v244 = vadd.f32 %v143, %v243
    %v245 = vpop.f32.mrb[0].mxu0
    %246 = vdwg.mxu0
    %v247 = vld [vmem:[%s4] sm:$0xff]
    %v248 = vld [vmem:[%s4 + $0x8] sm:$0xff]
    %v249 = vld [vmem:[%s4 + $0x10] sm:$0xff]
    %v250 = vld [vmem:[%s4 + $0x18] sm:$0xff]
    %252 = vset.pattern.permute.xlu0 0
    %253 = vperm.xlu0 %252, %v247
    %v254 = vpop.permute.xlu0 %253
    %257 = vset.pattern.permute.xlu0 0
    %258 = vperm.xlu0 %257, %v248
    %v259 = vpop.permute.xlu0 %258
    %262 = vset.pattern.permute.xlu0 0
    %263 = vperm.xlu0 %262, %v249
    %v264 = vpop.permute.xlu0 %263
    %267 = vset.pattern.permute.xlu0 0
    %268 = vperm.xlu0 %267, %v250
    %v269 = vpop.permute.xlu0 %268
    %v271 = vadd.f32 %v229, %v254
    %v272 = vadd.f32 %v234, %v259
    %v273 = vadd.f32 %v239, %v264
    %v274 = vadd.f32 %v244, %v269
    %v275 = vmax.f32 %v271, 0.0
    %v276 = vmax.f32 %v272, 0.0
    %v277 = vmax.f32 %v273, 0.0
    %v278 = vmax.f32 %v274, 0.0
    %v279 = vld [vmem:[%s5] sm:$0xff]
    %v280 = vld [vmem:[%s5 + $0x8] sm:$0xff]
    %v281 = vld [vmem:[%s5 + $0x10] sm:$0xff]
    %v282 = vld [vmem:[%s5 + $0x18] sm:$0xff]
    %v283 = vld [vmem:[%s6] sm:$0xff]
    %v284 = vld [vmem:[%s6 + $0x8] sm:$0xff]
    %v285 = vld [vmem:[%s6 + $0x10] sm:$0xff]
    %v286 = vld [vmem:[%s6 + $0x18] sm:$0xff]
    %288 = vset.pattern.permute.xlu0 0
    %289 = vperm.xlu0 %288, %v283
    %v290 = vpop.permute.xlu0 %289
    %293 = vset.pattern.permute.xlu0 0
    %294 = vperm.xlu0 %293, %v284
    %v295 = vpop.permute.xlu0 %294
    %298 = vset.pattern.permute.xlu0 0
    %299 = vperm.xlu0 %298, %v285
    %v300 = vpop.permute.xlu0 %299
    %303 = vset.pattern.permute.xlu0 0
    %304 = vperm.xlu0 %303, %v286
    %v305 = vpop.permute.xlu0 %304
    %vm307 = vcmask 261120
    %v309 = vsel %vm307, %v279, 0
    %v312 = vsel %vm307, %v280, 0
    %v315 = vsel %vm307, %v281, 0
    %v318 = vsel %vm307, %v282, 0
    %320 = vmatprep.subr.mxu0 0.0
    %321 = vmatpush1.msra.mxu0 %v275
    %322 = vmatprep.subr.mxu0 0.0
    %323 = vmatpush1.msra.mxu0 %v276
    %324 = vmatprep.subr.mxu0 0.0
    %325 = vmatpush1.msra.mxu0 %v277
    %326 = vmatprep.subr.mxu0 0.0
    %327 = vmatpush1.msra.mxu0 %v278
    %328 = vmatprep.subr.mxu0 0.0
    %329 = vmatpush1.msra.mxu0 0.0
    %330 = vmatprep.subr.mxu0 0.0
    %331 = vmatpush1.msra.mxu0 0.0
    %332 = vmatprep.subr.mxu0 0.0
    %333 = vmatpush1.msra.mxu0 0.0
    %334 = vmatprep.subr.mxu0 0.0
    %335 = vmatpush1.msra.mxu0 0.0
    %336 = vmatprep.subr.mxu0 0.0
    %337 = vmatpush1.msra.mxu0 0.0
    %338 = vmatprep.subr.mxu0 0.0
    %339 = vmatpush1.msra.mxu0 0.0
    %340 = vmatprep.subr.mxu0 0.0
    %341 = vmatpush1.msra.mxu0 0.0
    %342 = vmatprep.subr.mxu0 0.0
    %343 = vmatpush1.msra.mxu0 0.0
    %344 = vmatprep.subr.mxu0 0.0
    %345 = vmatpush1.msra.mxu0 0.0
    %346 = vmatprep.subr.mxu0 0.0
    %347 = vmatpush1.msra.mxu0 0.0
    %348 = vmatprep.subr.mxu0 0.0
    %349 = vmatpush1.msra.mxu0 0.0
    %350 = vmatprep.subr.mxu0 0.0
    %351 = vmatpush1.msra.mxu0 0.0
    %352 = vmatprep.subr.mxu0 0.0
    %353 = vmatpush1.msra.mxu0 0.0
    %354 = vmatprep.subr.mxu0 0.0
    %355 = vmatpush1.msra.mxu0 0.0
    %356 = vmatprep.subr.mxu0 0.0
    %357 = vmatpush1.msra.mxu0 0.0
    %358 = vmatprep.subr.mxu0 0.0
    %359 = vmatpush1.msra.mxu0 0.0
    %360 = vmatprep.subr.mxu0 0.0
    %361 = vmatpush1.msra.mxu0 0.0
    %362 = vmatprep.subr.mxu0 0.0
    %363 = vmatpush1.msra.mxu0 0.0
    %364 = vmatprep.subr.mxu0 0.0
    %365 = vmatpush1.msra.mxu0 0.0
    %366 = vmatprep.subr.mxu0 0.0
    %367 = vmatpush1.msra.mxu0 0.0
    %368 = vmatprep.subr.mxu0 0.0
    %369 = vmatpush1.msra.mxu0 0.0
    %370 = vmatprep.subr.mxu0 0.0
    %371 = vmatpush1.msra.mxu0 0.0
    %372 = vmatprep.subr.mxu0 0.0
    %373 = vmatpush1.msra.mxu0 0.0
    %374 = vmatprep.subr.mxu0 0.0
    %375 = vmatpush1.msra.mxu0 0.0
    %376 = vmatprep.subr.mxu0 0.0
    %377 = vmatpush1.msra.mxu0 0.0
    %378 = vmatprep.subr.mxu0 0.0
    %379 = vmatpush1.msra.mxu0 0.0
    %380 = vmatprep.subr.mxu0 0.0
    %381 = vmatpush1.msra.mxu0 0.0
    %382 = vmatprep.subr.mxu0 0.0
    %383 = vmatpush1.msra.mxu0 0.0
    %384 = vmatprep.mubr.f32.mxu0 0.0
    %385 = vmatmul.mubr.f32.gmra.mrb[0].mxu0 %v309
    %v386 = vpop.f32.mrb[0].mxu0
    %v387 = vadd.f32 %v290, %v386
    %v388 = vpop.f32.mrb[0].mxu0
    %389 = vmatprep.mubr.f32.mxu0 0.0
    %390 = vmatmul.mubr.f32.gmra.mrb[0].mxu0 %v312
    %v391 = vpop.f32.mrb[0].mxu0
    %v392 = vadd.f32 %v295, %v391
    %v393 = vpop.f32.mrb[0].mxu0
    %394 = vmatprep.mubr.f32.mxu0 0.0
    %395 = vmatmul.mubr.f32.gmra.mrb[0].mxu0 %v315
    %v396 = vpop.f32.mrb[0].mxu0
    %v397 = vadd.f32 %v300, %v396
    %v398 = vpop.f32.mrb[0].mxu0
    %399 = vmatprep.mubr.f32.mxu0 0.0
    %400 = vmatmul.mubr.f32.gmra.mrb[0].mxu0 %v318
    %v401 = vpop.f32.mrb[0].mxu0
    %v402 = vadd.f32 %v305, %v401
    %v403 = vpop.f32.mrb[0].mxu0
    %404 = vdwg.mxu0
    %v405 = vmax.f32 %v387, 0.0
    %v406 = vmax.f32 %v392, 0.0
    %v407 = vmax.f32 %v397, 0.0
    %v408 = vmax.f32 %v402, 0.0
    %v409 = vld [vmem:[%s7] sm:$0xff]
    %v410 = vld [vmem:[%s7 + $0x8] sm:$0xff]
    %v411 = vld [vmem:[%s7 + $0x10] sm:$0xff]
    %v412 = vld [vmem:[%s7 + $0x18] sm:$0xff]
    %414 = vset.pattern.permute.xlu0 0
    %415 = vperm.xlu0 %414, %v409
    %v416 = vpop.permute.xlu0 %415
    %419 = vset.pattern.permute.xlu0 0
    %420 = vperm.xlu0 %419, %v410
    %v421 = vpop.permute.xlu0 %420
    %424 = vset.pattern.permute.xlu0 0
    %425 = vperm.xlu0 %424, %v411
    %v426 = vpop.permute.xlu0 %425
    %429 = vset.pattern.permute.xlu0 0
    %430 = vperm.xlu0 %429, %v412
    %v431 = vpop.permute.xlu0 %430
    %v433 = vmul.f32 %v405, %v416
    %v434 = vmul.f32 %v406, %v421
    %v435 = vmul.f32 %v407, %v426
    %v436 = vmul.f32 %v408, %v431
    %vm437 = vcmask 15360
    %v438 = vsel %vm437, %v433, 0.0
    %v439 = vsel %vm437, %v434, 0.0
    %v440 = vadd.f32 %v438, %v439
    %v441 = vsel %vm437, %v435, 0.0
    %v442 = vadd.f32 %v440, %v441
    %v443 = vsel %vm437, %v436, 0.0
    %v444 = vadd.f32 %v442, %v443
    %v445 = vrot.slane %v444, 4
    %v446 = vadd.f32 %v444, %v445
    %v447 = vrot.slane %v446, 2
    %v448 = vadd.f32 %v446, %v447
    %v449 = vrot.slane %v448, 1
    %v450 = vadd.f32 %v448, %v449
    %v451 = vld [vmem:[#allocation2] sm:$0x1]
    %453 = vset.pattern.permute.xlu0 0
    %454 = vperm.xlu0 %453, %v451
    %v455 = vpop.permute.xlu0 %454
    %v457 = vlaneseq
    %v458 = vshrl.u32 %v457, 7
    %v459 = vsub.s32 0, %v458
    %v460 = vrot.slane %v455, %v459
    %v461 = vadd.f32 %v450, %v460
    %vm462 = vcmask 8192
    %463 = vst.msk [vmem:[#allocation3] sm:$0x1] %vm462, %v461
    // Predicated region
    $region38: #{critic_forward.1} parent=1 // pred_check
      _
    $region39: #{critic_forward.1} parent=1 // pred_check_branch
      %465 = sbr.rel (0) target = $region41
    $region40: #{critic_forward.1} parent=1 // pred_region
      %s467 = ssub.s32 16, 16
      %468 = vsyncadd [#allocation4], %s467
      %s470 = sshll.u32 [#allocation3], 4
      %s471 = int_to_ptr.vmem [resolvable:$true] %s470
      %473 = dma.vmem_to_hbm [thread:$0]  %s471, 16, %s9, [#allocation4]
    $region41: #{critic_forward.1} parent=1 // pred_fallthru
      _
    // Predicated region
    $region42: #{critic_forward.1} parent=1 // pred_check
      _
    $region43: #{critic_forward.1} parent=1 // pred_check_branch
      %475 = sbr.rel (0) target = $region45
    $region44: #{critic_forward.1} parent=1 // pred_region
      %476 = dma.done [#allocation4], 16
    $region45: #{critic_forward.1} parent=1 // pred_fallthru
      _
    %477 = vsyncpa [#allocation4], 1

</llo_original>
